<compile_context>
chip_gen: v5e
topology: v5e:2x2
jax: 0.10.0
libtpu: 0.0.40
codegen_flags: <defaults>
</compile_context>

<pallas_src>
import functools

import jax
import jax.numpy as jnp
from jax.experimental import pallas as pl
from jax.experimental.pallas import tpu as pltpu

_LANE = 128


def _round_up(x, m):
    return (x + m - 1) // m * m


def _cdiv(a, b):
    return (a + b - 1) // b


def _vmem_capacity_bytes():
    """Physical VMEM per core; conservative fallback if the query is unavailable."""
    try:
        return int(pltpu.get_tpu_info().vmem_capacity_bytes)
    except Exception:
        return 64 << 20  # v7x per-TensorCore size (smallest of current generations)


def _mlp3_kernel(x_ref, w1_ref, w2_ref, w3_ref, bias_ref, o_ref, *, hp, n_out):
    """One batch tile: (tb, n_in) @ resident weights -> (tb, n_out)."""
    cdt = w1_ref.dtype
    # Cast to compute dtype in-kernel (saves a wrapper-side HBM write+read of x).
    x = x_ref[...].astype(cdt)

    # Static lane-aligned slices of the fused f32 bias row.
    b1 = bias_ref[:, 0:hp]
    b2 = bias_ref[:, hp:2 * hp]
    b3 = bias_ref[:, 2 * hp:2 * hp + n_out]

    # fc1 + ReLU (f32 accumulation on the MXU).
    h = jnp.dot(x, w1_ref[...], preferred_element_type=jnp.float32) + b1
    h = jnp.maximum(h, 0.0).astype(cdt)
    # fc2 + ReLU
    h = jnp.dot(h, w2_ref[...], preferred_element_type=jnp.float32) + b2
    h = jnp.maximum(h, 0.0).astype(cdt)
    # fc3 (+ Identity output activation)
    out = jnp.dot(h, w3_ref[...], preferred_element_type=jnp.float32) + b3
    o_ref[...] = out.astype(o_ref.dtype)


def net_3xfcrelu_forward(x, w1, b1, w2, b2, w3, b3, *,
                         compute_dtype=jnp.bfloat16, batch_tile=256):
    """x: [B, n_in]; w_i: [in, out] (transposed vs. PyTorch); b_i: [out]. Returns [B, n_out]."""
    B, n_in = x.shape
    n_hidden = w1.shape[1]
    n_out = w3.shape[1]
    out_dtype = x.dtype
    cd = jnp.dtype(compute_dtype)

    # Hidden dim padded to a lane multiple (weights only -- one-time cost; padded rows/cols
    # are zeros so the valid region of the result is exact). n_in / n_out stay unpadded.
    hp = _round_up(n_hidden, _LANE)

    # Batch tile: sublane-aligned; guarantee >= 2 grid steps when B allows it so the
    # "parallel" batch axis can shard across v7x's two TensorCores.
    sub = max(8, 32 // jnp.dtype(x.dtype).itemsize)
    if B <= sub:
        tb = B
    else:
        tb = _round_up(min(batch_tile, B), sub)
        half = _round_up(_cdiv(B, 2), sub)
        if tb >= B and half < B:
            tb = half
    n_tiles = _cdiv(B, tb)

    w1_p = jnp.pad(w1, ((0, 0), (0, hp - n_hidden))).astype(cd)
    w2_p = jnp.pad(w2, ((0, hp - n_hidden), (0, hp - n_hidden))).astype(cd)
    w3_p = jnp.pad(w3, ((0, hp - n_hidden), (0, 0))).astype(cd)
    bias_all = jnp.concatenate([
        jnp.pad(b1, (0, hp - n_hidden)),
        jnp.pad(b2, (0, hp - n_hidden)),
        b3,
    ]).reshape(1, -1).astype(jnp.float32)

    # VMEM budget (generation-aware). Weight bytes counted twice in case the resident operands
    # end up double-buffered (fallback path); the Buffered(1) path uses less than estimated.
    weight_bytes = (n_in * hp + hp * hp + hp * n_out) * cd.itemsize + bias_all.size * 4
    io_bytes = 2 * tb * (n_in * jnp.dtype(x.dtype).itemsize
                         + n_out * jnp.dtype(out_dtype).itemsize)
    interm_bytes = 2 * tb * hp * 4  # two live f32 intermediates per tile
    vmem_est = 2 * weight_bytes + io_bytes + interm_bytes

    vmem_cap = _vmem_capacity_bytes()
    vmem_budget = vmem_cap - max(8 << 20, vmem_cap // 8)  # headroom for compiler scratch
    vmem_limit = None
    if vmem_est > (16 << 20):  # v5e scoped default is 16 MiB (smallest across generations)
        vmem_limit = min(int(vmem_est * 1.25), vmem_budget)
    # TODO(synk): if vmem_est > vmem_budget, stream w2/w3 column tiles instead of residency.

    flops = 2 * B * (n_in * hp + hp * hp + hp * n_out)
    bytes_accessed = int(x.size * jnp.dtype(x.dtype).itemsize + weight_bytes
                         + B * n_out * jnp.dtype(out_dtype).itemsize)

    kernel = functools.partial(_mlp3_kernel, hp=hp, n_out=n_out)
    compiler_params = pltpu.CompilerParams(
        dimension_semantics=("parallel",), vmem_limit_bytes=vmem_limit)
    cost = pl.CostEstimate(flops=flops, transcendentals=0, bytes_accessed=bytes_accessed)

    def resident_spec(shape, single_buffer):
        index_map = lambda i: (0,) * len(shape)
        if single_buffer:
            return pl.BlockSpec(shape, index_map, pipeline_mode=pl.Buffered(1))
        return pl.BlockSpec(shape, index_map)

    def build_call(single_buffer):
        in_specs = [
            pl.BlockSpec((tb, n_in), lambda i: (i, 0)),            # x tile (pipelined)
            resident_spec((n_in, hp), single_buffer),              # w1 (resident)
            resident_spec((hp, hp), single_buffer),                # w2 (resident)
            resident_spec((hp, n_out), single_buffer),             # w3 (resident)
            resident_spec((1, 2 * hp + n_out), single_buffer),     # fused biases (resident)
        ]
        return pl.pallas_call(
            kernel,
            out_shape=jax.ShapeDtypeStruct((B, n_out), out_dtype),
            grid=(n_tiles,),
            in_specs=in_specs,
            out_specs=pl.BlockSpec((tb, n_out), lambda i: (i, 0)),
            compiler_params=compiler_params,
            cost_estimate=cost,
        )

    args = (x, w1_p, w2_p, w3_p, bias_all)
    if hasattr(pl, "Buffered"):
        try:
            out = build_call(True)(*args)
            jax.block_until_ready(out)  # surface any lowering issue here (no-op under jit)
            return out
        except Exception:
            pass  # fall back to default (double-buffered) resident operands
    return build_call(False)(*args)


def init_params(key, n_in, n_out, n_hidden, dtype=jnp.float32):
    """Init mimicking torch.nn.Linear (U(-1/sqrt(fan_in), +1/sqrt(fan_in))).
    Weights returned in [in, out] layout (transposed from PyTorch)."""
    ks = jax.random.split(key, 6)

    def linear(kw, kb, fan_in, fan_out):
        bound = 1.0 / jnp.sqrt(jnp.array(fan_in, dtype))
        w = jax.random.uniform(kw, (fan_in, fan_out), dtype, -bound, bound)
        b = jax.random.uniform(kb, (fan_out,), dtype, -bound, bound)
        return w, b

    w1, b1 = linear(ks[0], ks[1], n_in, n_hidden)
    w2, b2 = linear(ks[2], ks[3], n_hidden, n_hidden)
    w3, b3 = linear(ks[4], ks[5], n_hidden, n_out)
    return w1, b1, w2, b2, w3, b3


def _ref_forward(x, w1, b1, w2, b2, w3, b3):
    h = jnp.maximum(x @ w1 + b1, 0.0)
    h = jnp.maximum(h @ w2 + b2, 0.0)
    return h @ w3 + b3  # activation_out = Identity


if __name__ == "__main__":
    # Small shapes consistent with the module: batch=8, n_in=16, hidden=32, out=8.
    B, n_in, n_hidden, n_out = 8, 16, 32, 8

    key = jax.random.PRNGKey(0)
    kx, kp = jax.random.split(key)
    x = jax.random.normal(kx, (B, n_in), jnp.float32)
    w1, b1, w2, b2, w3, b3 = init_params(kp, n_in, n_out, n_hidden)
    ref = _ref_forward(x, w1, b1, w2, b2, w3, b3)

    # 1) Default path: bf16 compute, f32 accumulation (loose tolerance vs. f32 reference).
    out = net_3xfcrelu_forward(x, w1, b1, w2, b2, w3, b3)
    out = jax.block_until_ready(out)
    assert out.shape == (B, n_out)
    assert jnp.allclose(out, ref, atol=5e-2, rtol=5e-2)

    # 2) f32 compute, multi-tile batch grid with a partial last tile (B=36, tb=8 -> 5 steps).
    B2 = 36
    x2 = jax.random.normal(jax.random.PRNGKey(1), (B2, n_in), jnp.float32)
    out2 = net_3xfcrelu_forward(x2, w1, b1, w2, b2, w3, b3,
                                compute_dtype=jnp.float32, batch_tile=8)
    out2 = jax.block_until_ready(out2)
    ref2 = _ref_forward(x2, w1, b1, w2, b2, w3, b3)
    assert out2.shape == (B2, n_out)
    assert jnp.allclose(out2, ref2, atol=1e-4, rtol=1e-4)

    # 3) Default batch_tile: B=40 splits into 2 tiles (>=2 grid steps for v7x megacore).
    B3 = 40
    x3 = jax.random.normal(jax.random.PRNGKey(2), (B3, n_in), jnp.float32)
    out3 = net_3xfcrelu_forward(x3, w1, b1, w2, b2, w3, b3, compute_dtype=jnp.float32)
    out3 = jax.block_until_ready(out3)
    ref3 = _ref_forward(x3, w1, b1, w2, b2, w3, b3)
    assert out3.shape == (B3, n_out)
    assert jnp.allclose(out3, ref3, atol=1e-4, rtol=1e-4)

    print("KERNEL_OK")
</pallas_src>

<mosaic_0001>
module attributes {stable_mosaic.version = 11 : i64} {
  func.func @_mlp3_kernel(%arg0: i32, %arg1: memref<8x16xf32, #tpu.memory_space<vmem>>, %arg2: memref<16x128xbf16, #tpu.memory_space<vmem>>, %arg3: memref<128x128xbf16, #tpu.memory_space<vmem>>, %arg4: memref<128x8xbf16, #tpu.memory_space<vmem>>, %arg5: memref<1x264xf32, #tpu.memory_space<vmem>>, %arg6: memref<8x8xf32, #tpu.memory_space<vmem>>) attributes {dimension_semantics = [#tpu.dimension_semantics<parallel>], iteration_bounds = array<i64: 1>, scalar_prefetch = 0 : i64, scratch_operands = 0 : i64, tpu.core_type = #tpu.core_type<tc>, window_params = [{transform_indices = @transform_0, window_bounds = array<i64: 8, 16>}, {pipeline_mode = #tpu.pipeline_mode<synchronous>, transform_indices = @transform_1, window_bounds = array<i64: 16, 128>}, {pipeline_mode = #tpu.pipeline_mode<synchronous>, transform_indices = @transform_2, window_bounds = array<i64: 128, 128>}, {pipeline_mode = #tpu.pipeline_mode<synchronous>, transform_indices = @transform_3, window_bounds = array<i64: 128, 8>}, {pipeline_mode = #tpu.pipeline_mode<synchronous>, transform_indices = @transform_4, window_bounds = array<i64: 1, 264>}, {transform_indices = @transform_5, window_bounds = array<i64: 8, 8>}]} {
    %c0 = arith.constant 0 : index
    %c0_0 = arith.constant 0 : index
    %0 = vector.load %arg1[%c0, %c0_0] : memref<8x16xf32, #tpu.memory_space<vmem>>, vector<8x16xf32>
    %1 = arith.truncf %0 : vector<8x16xf32> to vector<8x16xbf16>
    %c0_1 = arith.constant 0 : index
    %c0_2 = arith.constant 0 : index
    %2 = vector.load %arg5[%c0_1, %c0_2] : memref<1x264xf32, #tpu.memory_space<vmem>>, vector<1x128xf32>
    %c0_3 = arith.constant 0 : index
    %c128 = arith.constant 128 : index
    %3 = vector.load %arg5[%c0_3, %c128] : memref<1x264xf32, #tpu.memory_space<vmem>>, vector<1x128xf32>
    %c0_4 = arith.constant 0 : index
    %c256 = arith.constant 256 : index
    %4 = vector.load %arg5[%c0_4, %c256] : memref<1x264xf32, #tpu.memory_space<vmem>>, vector<1x8xf32>
    %c0_5 = arith.constant 0 : index
    %c0_6 = arith.constant 0 : index
    %5 = vector.load %arg2[%c0_5, %c0_6] : memref<16x128xbf16, #tpu.memory_space<vmem>>, vector<16x128xbf16>
    %cst = arith.constant dense<0.000000e+00> : vector<8x128xf32>
    %6 = tpu.matmul %1, %5, %cst {dimension_numbers = #tpu.dot_dimension_numbers<[1], [0], [0], [1], [0, 0, 1, 1], [], []>} : vector<8x16xbf16>, vector<16x128xbf16>, vector<8x128xf32> -> vector<8x128xf32>
    %7 = vector.broadcast %2 : vector<1x128xf32> to vector<8x128xf32>
    %8 = arith.addf %6, %7 : vector<8x128xf32>
    %cst_7 = arith.constant 0.000000e+00 : f32
    %9 = vector.broadcast %cst_7 : f32 to vector<8x128xf32>
    %10 = arith.maximumf %8, %9 : vector<8x128xf32>
    %11 = arith.truncf %10 : vector<8x128xf32> to vector<8x128xbf16>
    %c0_8 = arith.constant 0 : index
    %c0_9 = arith.constant 0 : index
    %12 = vector.load %arg3[%c0_8, %c0_9] : memref<128x128xbf16, #tpu.memory_space<vmem>>, vector<128x128xbf16>
    %cst_10 = arith.constant dense<0.000000e+00> : vector<8x128xf32>
    %13 = tpu.matmul %11, %12, %cst_10 {dimension_numbers = #tpu.dot_dimension_numbers<[1], [0], [0], [1], [0, 0, 1, 1], [], []>} : vector<8x128xbf16>, vector<128x128xbf16>, vector<8x128xf32> -> vector<8x128xf32>
    %14 = vector.broadcast %3 : vector<1x128xf32> to vector<8x128xf32>
    %15 = arith.addf %13, %14 : vector<8x128xf32>
    %cst_11 = arith.constant 0.000000e+00 : f32
    %16 = vector.broadcast %cst_11 : f32 to vector<8x128xf32>
    %17 = arith.maximumf %15, %16 : vector<8x128xf32>
    %18 = arith.truncf %17 : vector<8x128xf32> to vector<8x128xbf16>
    %c0_12 = arith.constant 0 : index
    %c0_13 = arith.constant 0 : index
    %19 = vector.load %arg4[%c0_12, %c0_13] : memref<128x8xbf16, #tpu.memory_space<vmem>>, vector<128x8xbf16>
    %cst_14 = arith.constant dense<0.000000e+00> : vector<8x8xf32>
    %20 = tpu.matmul %18, %19, %cst_14 {dimension_numbers = #tpu.dot_dimension_numbers<[1], [0], [0], [1], [0, 0, 1, 1], [], []>} : vector<8x128xbf16>, vector<128x8xbf16>, vector<8x8xf32> -> vector<8x8xf32>
    %21 = vector.broadcast %4 : vector<1x8xf32> to vector<8x8xf32>
    %22 = arith.addf %20, %21 : vector<8x8xf32>
    %c0_15 = arith.constant 0 : index
    %c0_16 = arith.constant 0 : index
    %23 = vector.load %arg6[%c0_15, %c0_16] : memref<8x8xf32, #tpu.memory_space<vmem>>, vector<8x8xf32>
    tpu.vector_store %arg6[%c0_15, %c0_16], %22 {strides = array<i32>} : memref<8x8xf32, #tpu.memory_space<vmem>>, vector<8x8xf32>,
    return
  }
  func.func @transform_0(%arg0: i32) -> (i32, i32) {
    %c0_i32 = arith.constant 0 : i32
    %c0_i32_0 = arith.constant 0 : i32
    return %arg0, %c0_i32 : i32, i32
  }
  func.func @transform_1(%arg0: i32) -> (i32, i32) {
    %c0_i32 = arith.constant 0 : i32
    %c0_i32_0 = arith.constant 0 : i32
    %c0_i32_1 = arith.constant 0 : i32
    return %c0_i32, %c0_i32_0 : i32, i32
  }
  func.func @transform_2(%arg0: i32) -> (i32, i32) {
    %c0_i32 = arith.constant 0 : i32
    %c0_i32_0 = arith.constant 0 : i32
    %c0_i32_1 = arith.constant 0 : i32
    return %c0_i32, %c0_i32_0 : i32, i32
  }
  func.func @transform_3(%arg0: i32) -> (i32, i32) {
    %c0_i32 = arith.constant 0 : i32
    %c0_i32_0 = arith.constant 0 : i32
    %c0_i32_1 = arith.constant 0 : i32
    return %c0_i32, %c0_i32_0 : i32, i32
  }
  func.func @transform_4(%arg0: i32) -> (i32, i32) {
    %c0_i32 = arith.constant 0 : i32
    %c0_i32_0 = arith.constant 0 : i32
    %c0_i32_1 = arith.constant 0 : i32
    return %c0_i32, %c0_i32_0 : i32, i32
  }
  func.func @transform_5(%arg0: i32) -> (i32, i32) {
    %c0_i32 = arith.constant 0 : i32
    %c0_i32_0 = arith.constant 0 : i32
    return %arg0, %c0_i32 : i32, i32
  }
}

module attributes {stable_mosaic.version = 11 : i64} {
  func.func @_mlp3_kernel(%arg0: i32, %arg1: memref<8x16xf32, #tpu.memory_space<vmem>>, %arg2: memref<16x128xbf16, #tpu.memory_space<vmem>>, %arg3: memref<128x128xbf16, #tpu.memory_space<vmem>>, %arg4: memref<128x8xbf16, #tpu.memory_space<vmem>>, %arg5: memref<1x264xf32, #tpu.memory_space<vmem>>, %arg6: memref<8x8xf32, #tpu.memory_space<vmem>>) attributes {dimension_semantics = [#tpu.dimension_semantics<parallel>], iteration_bounds = array<i64: 1>, scalar_prefetch = 0 : i64, scratch_operands = 0 : i64, tpu.core_type = #tpu.core_type<tc>, window_params = [{transform_indices = @transform_0, window_bounds = array<i64: 8, 16>}, {pipeline_mode = #tpu.pipeline_mode<synchronous>, transform_indices = @transform_1, window_bounds = array<i64: 16, 128>}, {pipeline_mode = #tpu.pipeline_mode<synchronous>, transform_indices = @transform_2, window_bounds = array<i64: 128, 128>}, {pipeline_mode = #tpu.pipeline_mode<synchronous>, transform_indices = @transform_3, window_bounds = array<i64: 128, 8>}, {pipeline_mode = #tpu.pipeline_mode<synchronous>, transform_indices = @transform_4, window_bounds = array<i64: 1, 264>}, {transform_indices = @transform_5, window_bounds = array<i64: 8, 8>}]} {
    %c0 = arith.constant 0 : index
    %c0_0 = arith.constant 0 : index
    %0 = vector.load %arg1[%c0, %c0_0] : memref<8x16xf32, #tpu.memory_space<vmem>>, vector<8x16xf32>
    %1 = arith.truncf %0 : vector<8x16xf32> to vector<8x16xbf16>
    %c0_1 = arith.constant 0 : index
    %c0_2 = arith.constant 0 : index
    %2 = vector.load %arg5[%c0_1, %c0_2] : memref<1x264xf32, #tpu.memory_space<vmem>>, vector<1x128xf32>
    %c0_3 = arith.constant 0 : index
    %c128 = arith.constant 128 : index
    %3 = vector.load %arg5[%c0_3, %c128] : memref<1x264xf32, #tpu.memory_space<vmem>>, vector<1x128xf32>
    %c0_4 = arith.constant 0 : index
    %c256 = arith.constant 256 : index
    %4 = vector.load %arg5[%c0_4, %c256] : memref<1x264xf32, #tpu.memory_space<vmem>>, vector<1x8xf32>
    %c0_5 = arith.constant 0 : index
    %c0_6 = arith.constant 0 : index
    %5 = vector.load %arg2[%c0_5, %c0_6] : memref<16x128xbf16, #tpu.memory_space<vmem>>, vector<16x128xbf16>
    %cst = arith.constant dense<0.000000e+00> : vector<8x128xf32>
    %6 = tpu.matmul %1, %5, %cst {dimension_numbers = #tpu.dot_dimension_numbers<[1], [0], [0], [1], [0, 0, 1, 1], [], []>} : vector<8x16xbf16>, vector<16x128xbf16>, vector<8x128xf32> -> vector<8x128xf32>
    %7 = vector.broadcast %2 : vector<1x128xf32> to vector<8x128xf32>
    %8 = arith.addf %6, %7 : vector<8x128xf32>
    %cst_7 = arith.constant 0.000000e+00 : f32
    %9 = vector.broadcast %cst_7 : f32 to vector<8x128xf32>
    %10 = arith.maximumf %8, %9 : vector<8x128xf32>
    %11 = arith.truncf %10 : vector<8x128xf32> to vector<8x128xbf16>
    %c0_8 = arith.constant 0 : index
    %c0_9 = arith.constant 0 : index
    %12 = vector.load %arg3[%c0_8, %c0_9] : memref<128x128xbf16, #tpu.memory_space<vmem>>, vector<128x128xbf16>
    %cst_10 = arith.constant dense<0.000000e+00> : vector<8x128xf32>
    %13 = tpu.matmul %11, %12, %cst_10 {dimension_numbers = #tpu.dot_dimension_numbers<[1], [0], [0], [1], [0, 0, 1, 1], [], []>} : vector<8x128xbf16>, vector<128x128xbf16>, vector<8x128xf32> -> vector<8x128xf32>
    %14 = vector.broadcast %3 : vector<1x128xf32> to vector<8x128xf32>
    %15 = arith.addf %13, %14 : vector<8x128xf32>
    %cst_11 = arith.constant 0.000000e+00 : f32
    %16 = vector.broadcast %cst_11 : f32 to vector<8x128xf32>
    %17 = arith.maximumf %15, %16 : vector<8x128xf32>
    %18 = arith.truncf %17 : vector<8x128xf32> to vector<8x128xbf16>
    %c0_12 = arith.constant 0 : index
    %c0_13 = arith.constant 0 : index
    %19 = vector.load %arg4[%c0_12, %c0_13] : memref<128x8xbf16, #tpu.memory_space<vmem>>, vector<128x8xbf16>
    %cst_14 = arith.constant dense<0.000000e+00> : vector<8x8xf32>
    %20 = tpu.matmul %18, %19, %cst_14 {dimension_numbers = #tpu.dot_dimension_numbers<[1], [0], [0], [1], [0, 0, 1, 1], [], []>} : vector<8x128xbf16>, vector<128x8xbf16>, vector<8x8xf32> -> vector<8x8xf32>
    %21 = vector.broadcast %4 : vector<1x8xf32> to vector<8x8xf32>
    %22 = arith.addf %20, %21 : vector<8x8xf32>
    %c0_15 = arith.constant 0 : index
    %c0_16 = arith.constant 0 : index
    %23 = vector.load %arg6[%c0_15, %c0_16] : memref<8x8xf32, #tpu.memory_space<vmem>>, vector<8x8xf32>
    tpu.vector_store %arg6[%c0_15, %c0_16], %22 {strides = array<i32>} : memref<8x8xf32, #tpu.memory_space<vmem>>, vector<8x8xf32>,
    return
  }
  func.func @transform_0(%arg0: i32) -> (i32, i32) {
    %c0_i32 = arith.constant 0 : i32
    %c0_i32_0 = arith.constant 0 : i32
    return %arg0, %c0_i32 : i32, i32
  }
  func.func @transform_1(%arg0: i32) -> (i32, i32) {
    %c0_i32 = arith.constant 0 : i32
    %c0_i32_0 = arith.constant 0 : i32
    %c0_i32_1 = arith.constant 0 : i32
    return %c0_i32, %c0_i32_0 : i32, i32
  }
  func.func @transform_2(%arg0: i32) -> (i32, i32) {
    %c0_i32 = arith.constant 0 : i32
    %c0_i32_0 = arith.constant 0 : i32
    %c0_i32_1 = arith.constant 0 : i32
    return %c0_i32, %c0_i32_0 : i32, i32
  }
  func.func @transform_3(%arg0: i32) -> (i32, i32) {
    %c0_i32 = arith.constant 0 : i32
    %c0_i32_0 = arith.constant 0 : i32
    %c0_i32_1 = arith.constant 0 : i32
    return %c0_i32, %c0_i32_0 : i32, i32
  }
  func.func @transform_4(%arg0: i32) -> (i32, i32) {
    %c0_i32 = arith.constant 0 : i32
    %c0_i32_0 = arith.constant 0 : i32
    %c0_i32_1 = arith.constant 0 : i32
    return %c0_i32, %c0_i32_0 : i32, i32
  }
  func.func @transform_5(%arg0: i32) -> (i32, i32) {
    %c0_i32 = arith.constant 0 : i32
    %c0_i32_0 = arith.constant 0 : i32
    return %arg0, %c0_i32 : i32, i32
  }
}

</mosaic_0001>

<llo_original>
// kernel: tpu_custom_call.1
$region0: #{tpu_custom_call.1}
  #allocation0 [shape = 'u32[]', space=smem, size = 0x4, offset = 0x4, fixed_abs, tag = 'smem constant byte address 0x4 - core index']
  #allocation1 [shape = 'u32[72,128]{1,0:T(1,128)}', space=vmem, size = 0x9000, scoped, tag = 'internal scratch']
  %s0 = inlined_call_operand.hbm [shape: f32[8,16], index: 0, kind: input, shape index: {}]
  %s1 = inlined_call_operand.hbm [shape: bf16[16,128], index: 1, kind: input, shape index: {}]
  %s2 = inlined_call_operand.vmem [shape: bf16[128,128], index: 2, kind: input, shape index: {}]
  %s3 = inlined_call_operand.vmem [shape: bf16[128,8], index: 3, kind: input, shape index: {}]
  %s4 = inlined_call_operand.vmem [shape: f32[1,264], index: 4, kind: input, shape index: {}]
  %s5 = inlined_call_operand.hbm [shape: f32[8,8], index: 5, kind: output, shape index: {}]
  %s6 = sld [smem:[#allocation0]]
  $region38: #{tpu_custom_call.1} parent=0
    _
  %s8 = ssub.s32 1, %s6
  %s9 = scalar_select 0, %s8, %s6
  $region1: #{tpu_custom_call.1} parent=0
    #allocation2 [shape = 'u8[4096]{0}', space=vmem, size = 0x1000, scoped, tag = 'input window, operand 0, single buffered']
    #allocation3 [shape = 's32[1]{0}', space=sflag, size = 0x4, scoped, tag = 'scoped memory for tpu_custom_call.1']
    #allocation4 [shape = 's32[1]{0}', space=sflag, size = 0x4, scoped, tag = 'scoped memory for tpu_custom_call.1']
    #allocation5 [shape = 'u8[4096]{0}', space=vmem, size = 0x1000, scoped, tag = 'input window, operand 1, single buffered']
    #allocation6 [shape = 's32[1]{0}', space=sflag, size = 0x4, scoped, tag = 'scoped memory for tpu_custom_call.1']
    #allocation7 [shape = 'u8[4096]{0}', space=vmem, size = 0x1000, scoped, tag = 'output window, operand 0, single buffered']
    %10 = vsyncpa [#allocation3], 0
    %11 = vsyncpa [#allocation6], 0
    %12 = vsyncpa [#allocation4], 0
    // Predicated region
    $region2: #{tpu_custom_call.1} parent=1 // pred_check
      _
    $region3: #{tpu_custom_call.1} parent=1 // pred_check_branch
      %14 = sbr.rel (0) target = $region5
    $region4: #{tpu_custom_call.1} parent=1 // pred_region
      %16 = vsyncadd [#allocation3], 0
      %s18 = sshll.u32 %s0, 4
      %s19 = int_to_ptr.hbm [resolvable:$true] %s18
      %s20 = sshll.u32 [#allocation2], 4
      %s21 = int_to_ptr.vmem [resolvable:$true] %s20
      %23 = dma.hbm_to_vmem [thread:$0]  %s19, 128, %s21, [#allocation3]
    $region5: #{tpu_custom_call.1} parent=1 // pred_fallthru
      _
    // Predicated region
    $region6: #{tpu_custom_call.1} parent=1 // pred_check
      _
    $region7: #{tpu_custom_call.1} parent=1 // pred_check_branch
      %25 = sbr.rel (0) target = $region9
    $region8: #{tpu_custom_call.1} parent=1 // pred_region
      %27 = vsyncadd [#allocation6], 0
      %s28 = sshll.u32 %s1, 4
      %s29 = int_to_ptr.hbm [resolvable:$true] %s28
      %s30 = sshll.u32 [#allocation5], 4
      %s31 = int_to_ptr.vmem [resolvable:$true] %s30
      %36 = dma.hbm_to_vmem [thread:$0]  %s29, 128, %s31, [#allocation6], 64, 64, 4
    $region9: #{tpu_custom_call.1} parent=1 // pred_fallthru
      _
    // Predicated region
    $region10: #{tpu_custom_call.1} parent=1 // pred_check
      _
    $region11: #{tpu_custom_call.1} parent=1 // pred_check_branch
      %38 = sbr.rel (0) target = $region13
    $region12: #{tpu_custom_call.1} parent=1 // pred_region
      _
    $region13: #{tpu_custom_call.1} parent=1 // pred_fallthru
      _
    // Predicated region
    $region14: #{tpu_custom_call.1} parent=1 // pred_check
      _
    $region15: #{tpu_custom_call.1} parent=1 // pred_check_branch
      %40 = sbr.rel (0) target = $region17
    $region16: #{tpu_custom_call.1} parent=1 // pred_region
      _
    $region17: #{tpu_custom_call.1} parent=1 // pred_fallthru
      _
    // Predicated region
    $region18: #{tpu_custom_call.1} parent=1 // pred_check
      _
    $region19: #{tpu_custom_call.1} parent=1 // pred_check_branch
      %42 = sbr.rel (0) target = $region21
    $region20: #{tpu_custom_call.1} parent=1 // pred_region
      _
    $region21: #{tpu_custom_call.1} parent=1 // pred_fallthru
      _
    // Predicated region
    $region22: #{tpu_custom_call.1} parent=1 // pred_check
      _
    $region23: #{tpu_custom_call.1} parent=1 // pred_check_branch
      %44 = sbr.rel (0) target = $region25
    $region24: #{tpu_custom_call.1} parent=1 // pred_region
      %46 = dma.done [#allocation3], 128
    $region25: #{tpu_custom_call.1} parent=1 // pred_fallthru
      _
    // Predicated region
    $region26: #{tpu_custom_call.1} parent=1 // pred_check
      _
    $region27: #{tpu_custom_call.1} parent=1 // pred_check_branch
      %48 = sbr.rel (0) target = $region29
    $region28: #{tpu_custom_call.1} parent=1 // pred_region
      %50 = dma.done [#allocation6], 128
    $region29: #{tpu_custom_call.1} parent=1 // pred_fallthru
      _
    %v52 = vld [vmem:[#allocation2] sm:$0xff]
    %v53 = vpack.c.bf16 %v52, %v52
    %v54 = vld [vmem:[%s4] sm:$0x1]
    %v55 = vld [vmem:[%s4 + $0x1] sm:$0x1]
    %v56 = vld [vmem:[%s4 + $0x2] sm:$0x1]
    %v57 = vld [vmem:[#allocation5] sm:$0xf]
    %v58 = vld [vmem:[#allocation5 + $0x4] sm:$0xf]
    %v60 = vperm.slane %v54, 0
    %v64 = vunpack.c.l.b16 %v57
    %v65 = vunpack.c.l.b16 %v58
    %v66 = vpack.c.b16 %v65, %v64
    %vm68 = vcmask 130048
    %v70 = vsel %vm68, %v53, 0
    %72 = vmatpush.bf16.msra.mxu0 0
    %73 = vmatpush.bf16.msra.mxu0 0
    %74 = vmatpush.bf16.msra.mxu0 0
    %75 = vmatpush.bf16.msra.mxu0 0
    %76 = vmatpush.bf16.msra.mxu0 0
    %77 = vmatpush.bf16.msra.mxu0 0
    %78 = vmatpush.bf16.msra.mxu0 0
    %79 = vmatpush.bf16.msra.mxu0 %v66
    %80 = vmatmul.bf16.gmra.mxu0 %v70
    %v81 = vpop.f32.mrf.mxu0
    %v82 = vadd.f32 %v60, %v81
    %v83 = vpop.f32.mrf.mxu0
    %84 = vdwg.mxu0
    %v85 = vmax.f32 %v82, 0.0
    %v86 = vpack.c.bf16 %v85, %v85
    %v87 = vld [vmem:[%s2] sm:$0xf]
    %v88 = vld [vmem:[%s2 + $0x4] sm:$0xf]
    %v89 = vld [vmem:[%s2 + $0x8] sm:$0xf]
    %v90 = vld [vmem:[%s2 + $0xc] sm:$0xf]
    %v91 = vld [vmem:[%s2 + $0x10] sm:$0xf]
    %v92 = vld [vmem:[%s2 + $0x14] sm:$0xf]
    %v93 = vld [vmem:[%s2 + $0x18] sm:$0xf]
    %v94 = vld [vmem:[%s2 + $0x1c] sm:$0xf]
    %v95 = vld [vmem:[%s2 + $0x20] sm:$0xf]
    %v96 = vld [vmem:[%s2 + $0x24] sm:$0xf]
    %v97 = vld [vmem:[%s2 + $0x28] sm:$0xf]
    %v98 = vld [vmem:[%s2 + $0x2c] sm:$0xf]
    %v99 = vld [vmem:[%s2 + $0x30] sm:$0xf]
    %v100 = vld [vmem:[%s2 + $0x34] sm:$0xf]
    %v101 = vld [vmem:[%s2 + $0x38] sm:$0xf]
    %v102 = vld [vmem:[%s2 + $0x3c] sm:$0xf]
    %v104 = vperm.slane %v55, 0
    %v122 = vunpack.c.l.b16 %v87
    %v123 = vunpack.c.l.b16 %v88
    %v124 = vunpack.c.l.b16 %v89
    %v125 = vunpack.c.l.b16 %v90
    %v126 = vunpack.c.l.b16 %v91
    %v127 = vunpack.c.l.b16 %v92
    %v128 = vunpack.c.l.b16 %v93
    %v129 = vunpack.c.l.b16 %v94
    %v130 = vunpack.c.l.b16 %v95
    %v131 = vunpack.c.l.b16 %v96
    %v132 = vunpack.c.l.b16 %v97
    %v133 = vunpack.c.l.b16 %v98
    %v134 = vunpack.c.l.b16 %v99
    %v135 = vunpack.c.l.b16 %v100
    %v136 = vunpack.c.l.b16 %v101
    %v137 = vunpack.c.l.b16 %v102
    %v138 = vpack.c.b16 %v123, %v122
    %v139 = vpack.c.b16 %v125, %v124
    %v140 = vpack.c.b16 %v127, %v126
    %v141 = vpack.c.b16 %v129, %v128
    %v142 = vpack.c.b16 %v131, %v130
    %v143 = vpack.c.b16 %v133, %v132
    %v144 = vpack.c.b16 %v135, %v134
    %v145 = vpack.c.b16 %v137, %v136
    %154 = vmatpush.bf16.msra.mxu0 %v145
    %155 = vmatpush.bf16.msra.mxu0 %v144
    %156 = vmatpush.bf16.msra.mxu0 %v143
    %157 = vmatpush.bf16.msra.mxu0 %v142
    %158 = vmatpush.bf16.msra.mxu0 %v141
    %159 = vmatpush.bf16.msra.mxu0 %v140
    %160 = vmatpush.bf16.msra.mxu0 %v139
    %161 = vmatpush.bf16.msra.mxu0 %v138
    %162 = vmatmul.bf16.gmra.mxu0 %v86
    %v163 = vpop.f32.mrf.mxu0
    %v164 = vadd.f32 %v104, %v163
    %v165 = vpop.f32.mrf.mxu0
    %166 = vdwg.mxu0
    %v167 = vmax.f32 %v164, 0.0
    %v168 = vpack.c.bf16 %v167, %v167
    %v169 = vld [vmem:[%s3] sm:$0xf]
    %v170 = vld [vmem:[%s3 + $0x4] sm:$0xf]
    %v171 = vld [vmem:[%s3 + $0x8] sm:$0xf]
    %v172 = vld [vmem:[%s3 + $0xc] sm:$0xf]
    %v173 = vld [vmem:[%s3 + $0x10] sm:$0xf]
    %v174 = vld [vmem:[%s3 + $0x14] sm:$0xf]
    %v175 = vld [vmem:[%s3 + $0x18] sm:$0xf]
    %v176 = vld [vmem:[%s3 + $0x1c] sm:$0xf]
    %v177 = vld [vmem:[%s3 + $0x20] sm:$0xf]
    %v178 = vld [vmem:[%s3 + $0x24] sm:$0xf]
    %v179 = vld [vmem:[%s3 + $0x28] sm:$0xf]
    %v180 = vld [vmem:[%s3 + $0x2c] sm:$0xf]
    %v181 = vld [vmem:[%s3 + $0x30] sm:$0xf]
    %v182 = vld [vmem:[%s3 + $0x34] sm:$0xf]
    %v183 = vld [vmem:[%s3 + $0x38] sm:$0xf]
    %v184 = vld [vmem:[%s3 + $0x3c] sm:$0xf]
    %v186 = vperm.slane %v56, 0
    %v204 = vunpack.c.l.b16 %v169
    %v205 = vunpack.c.l.b16 %v170
    %v206 = vunpack.c.l.b16 %v171
    %v207 = vunpack.c.l.b16 %v172
    %v208 = vunpack.c.l.b16 %v173
    %v209 = vunpack.c.l.b16 %v174
    %v210 = vunpack.c.l.b16 %v175
    %v211 = vunpack.c.l.b16 %v176
    %v212 = vunpack.c.l.b16 %v177
    %v213 = vunpack.c.l.b16 %v178
    %v214 = vunpack.c.l.b16 %v179
    %v215 = vunpack.c.l.b16 %v180
    %v216 = vunpack.c.l.b16 %v181
    %v217 = vunpack.c.l.b16 %v182
    %v218 = vunpack.c.l.b16 %v183
    %v219 = vunpack.c.l.b16 %v184
    %v220 = vpack.c.b16 %v205, %v204
    %v221 = vpack.c.b16 %v207, %v206
    %v222 = vpack.c.b16 %v209, %v208
    %v223 = vpack.c.b16 %v211, %v210
    %v224 = vpack.c.b16 %v213, %v212
    %v225 = vpack.c.b16 %v215, %v214
    %v226 = vpack.c.b16 %v217, %v216
    %v227 = vpack.c.b16 %v219, %v218
    %236 = vmatpush.bf16.msra.mxu0 %v227
    %237 = vmatpush.bf16.msra.mxu0 %v226
    %238 = vmatpush.bf16.msra.mxu0 %v225
    %239 = vmatpush.bf16.msra.mxu0 %v224
    %240 = vmatpush.bf16.msra.mxu0 %v223
    %241 = vmatpush.bf16.msra.mxu0 %v222
    %242 = vmatpush.bf16.msra.mxu0 %v221
    %243 = vmatpush.bf16.msra.mxu0 %v220
    %244 = vmatmul.bf16.gmra.mxu0 %v168
    %v245 = vpop.f32.mrf.mxu0
    %v246 = vadd.f32 %v186, %v245
    %v247 = vpop.f32.mrf.mxu0
    %248 = vdwg.mxu0
    %vm249 = vcmask 64512
    %250 = vst.msk [vmem:[#allocation7] sm:$0xff] %vm249, %v246
    // Predicated region
    $region30: #{tpu_custom_call.1} parent=1 // pred_check
      _
    $region31: #{tpu_custom_call.1} parent=1 // pred_check_branch
      %252 = sbr.rel (0) target = $region33
    $region32: #{tpu_custom_call.1} parent=1 // pred_region
      %254 = vsyncadd [#allocation4], 0
      %s256 = sshll.u32 [#allocation7], 4
      %s257 = int_to_ptr.vmem [resolvable:$true] %s256
      %s258 = sshll.u32 %s5, 4
      %s259 = int_to_ptr.hbm [resolvable:$true] %s258
      %261 = dma.vmem_to_hbm [thread:$0]  %s257, 128, %s259, [#allocation4]
    $region33: #{tpu_custom_call.1} parent=1 // pred_fallthru
      _
    // Predicated region
    $region34: #{tpu_custom_call.1} parent=1 // pred_check
      _
    $region35: #{tpu_custom_call.1} parent=1 // pred_check_branch
      %263 = sbr.rel (0) target = $region37
    $region36: #{tpu_custom_call.1} parent=1 // pred_region
      %265 = dma.done [#allocation4], 128
    $region37: #{tpu_custom_call.1} parent=1 // pred_fallthru
      _
    %266 = vsyncpa [#allocation3], 1
    %267 = vsyncpa [#allocation6], 1
    %268 = vsyncpa [#allocation4], 1

// kernel: tpu_custom_call.1
$region0: #{tpu_custom_call.1}
  #allocation0 [shape = 'u32[]', space=smem, size = 0x4, offset = 0x4, fixed_abs, tag = 'smem constant byte address 0x4 - core index']
  #allocation1 [shape = 'u32[72,128]{1,0:T(1,128)}', space=vmem, size = 0x9000, scoped, tag = 'internal scratch']
  %s0 = inlined_call_operand.hbm [shape: f32[8,16], index: 0, kind: input, shape index: {}]
  %s1 = inlined_call_operand.hbm [shape: bf16[16,128], index: 1, kind: input, shape index: {}]
  %s2 = inlined_call_operand.vmem [shape: bf16[128,128], index: 2, kind: input, shape index: {}]
  %s3 = inlined_call_operand.vmem [shape: bf16[128,8], index: 3, kind: input, shape index: {}]
  %s4 = inlined_call_operand.vmem [shape: f32[1,264], index: 4, kind: input, shape index: {}]
  %s5 = inlined_call_operand.hbm [shape: f32[8,8], index: 5, kind: output, shape index: {}]
  %s6 = sld [smem:[#allocation0]]
  $region38: #{tpu_custom_call.1} parent=0
    _
  %s8 = ssub.s32 1, %s6
  %s9 = scalar_select 0, %s8, %s6
  $region1: #{tpu_custom_call.1} parent=0
    #allocation2 [shape = 'u8[4096]{0}', space=vmem, size = 0x1000, scoped, tag = 'input window, operand 0, single buffered']
    #allocation3 [shape = 's32[1]{0}', space=sflag, size = 0x4, scoped, tag = 'scoped memory for tpu_custom_call.1']
    #allocation4 [shape = 's32[1]{0}', space=sflag, size = 0x4, scoped, tag = 'scoped memory for tpu_custom_call.1']
    #allocation5 [shape = 'u8[4096]{0}', space=vmem, size = 0x1000, scoped, tag = 'input window, operand 1, single buffered']
    #allocation6 [shape = 's32[1]{0}', space=sflag, size = 0x4, scoped, tag = 'scoped memory for tpu_custom_call.1']
    #allocation7 [shape = 'u8[4096]{0}', space=vmem, size = 0x1000, scoped, tag = 'output window, operand 0, single buffered']
    %10 = vsyncpa [#allocation3], 0
    %11 = vsyncpa [#allocation6], 0
    %12 = vsyncpa [#allocation4], 0
    // Predicated region
    $region2: #{tpu_custom_call.1} parent=1 // pred_check
      _
    $region3: #{tpu_custom_call.1} parent=1 // pred_check_branch
      %14 = sbr.rel (0) target = $region5
    $region4: #{tpu_custom_call.1} parent=1 // pred_region
      %16 = vsyncadd [#allocation3], 0
      %s18 = sshll.u32 %s0, 4
      %s19 = int_to_ptr.hbm [resolvable:$true] %s18
      %s20 = sshll.u32 [#allocation2], 4
      %s21 = int_to_ptr.vmem [resolvable:$true] %s20
      %23 = dma.hbm_to_vmem [thread:$0]  %s19, 128, %s21, [#allocation3]
    $region5: #{tpu_custom_call.1} parent=1 // pred_fallthru
      _
    // Predicated region
    $region6: #{tpu_custom_call.1} parent=1 // pred_check
      _
    $region7: #{tpu_custom_call.1} parent=1 // pred_check_branch
      %25 = sbr.rel (0) target = $region9
    $region8: #{tpu_custom_call.1} parent=1 // pred_region
      %27 = vsyncadd [#allocation6], 0
      %s28 = sshll.u32 %s1, 4
      %s29 = int_to_ptr.hbm [resolvable:$true] %s28
      %s30 = sshll.u32 [#allocation5], 4
      %s31 = int_to_ptr.vmem [resolvable:$true] %s30
      %36 = dma.hbm_to_vmem [thread:$0]  %s29, 128, %s31, [#allocation6], 64, 64, 4
    $region9: #{tpu_custom_call.1} parent=1 // pred_fallthru
      _
    // Predicated region
    $region10: #{tpu_custom_call.1} parent=1 // pred_check
      _
    $region11: #{tpu_custom_call.1} parent=1 // pred_check_branch
      %38 = sbr.rel (0) target = $region13
    $region12: #{tpu_custom_call.1} parent=1 // pred_region
      _
    $region13: #{tpu_custom_call.1} parent=1 // pred_fallthru
      _
    // Predicated region
    $region14: #{tpu_custom_call.1} parent=1 // pred_check
      _
    $region15: #{tpu_custom_call.1} parent=1 // pred_check_branch
      %40 = sbr.rel (0) target = $region17
    $region16: #{tpu_custom_call.1} parent=1 // pred_region
      _
    $region17: #{tpu_custom_call.1} parent=1 // pred_fallthru
      _
    // Predicated region
    $region18: #{tpu_custom_call.1} parent=1 // pred_check
      _
    $region19: #{tpu_custom_call.1} parent=1 // pred_check_branch
      %42 = sbr.rel (0) target = $region21
    $region20: #{tpu_custom_call.1} parent=1 // pred_region
      _
    $region21: #{tpu_custom_call.1} parent=1 // pred_fallthru
      _
    // Predicated region
    $region22: #{tpu_custom_call.1} parent=1 // pred_check
      _
    $region23: #{tpu_custom_call.1} parent=1 // pred_check_branch
      %44 = sbr.rel (0) target = $region25
    $region24: #{tpu_custom_call.1} parent=1 // pred_region
      %46 = dma.done [#allocation3], 128
    $region25: #{tpu_custom_call.1} parent=1 // pred_fallthru
      _
    // Predicated region
    $region26: #{tpu_custom_call.1} parent=1 // pred_check
      _
    $region27: #{tpu_custom_call.1} parent=1 // pred_check_branch
      %48 = sbr.rel (0) target = $region29
    $region28: #{tpu_custom_call.1} parent=1 // pred_region
      %50 = dma.done [#allocation6], 128
    $region29: #{tpu_custom_call.1} parent=1 // pred_fallthru
      _
    %v52 = vld [vmem:[#allocation2] sm:$0xff]
    %v53 = vpack.c.bf16 %v52, %v52
    %v54 = vld [vmem:[%s4] sm:$0x1]
    %v55 = vld [vmem:[%s4 + $0x1] sm:$0x1]
    %v56 = vld [vmem:[%s4 + $0x2] sm:$0x1]
    %v57 = vld [vmem:[#allocation5] sm:$0xf]
    %v58 = vld [vmem:[#allocation5 + $0x4] sm:$0xf]
    %v60 = vperm.slane %v54, 0
    %v64 = vunpack.c.l.b16 %v57
    %v65 = vunpack.c.l.b16 %v58
    %v66 = vpack.c.b16 %v65, %v64
    %vm68 = vcmask 130048
    %v70 = vsel %vm68, %v53, 0
    %72 = vmatpush.bf16.msra.mxu0 0
    %73 = vmatpush.bf16.msra.mxu0 0
    %74 = vmatpush.bf16.msra.mxu0 0
    %75 = vmatpush.bf16.msra.mxu0 0
    %76 = vmatpush.bf16.msra.mxu0 0
    %77 = vmatpush.bf16.msra.mxu0 0
    %78 = vmatpush.bf16.msra.mxu0 0
    %79 = vmatpush.bf16.msra.mxu0 %v66
    %80 = vmatmul.bf16.gmra.mxu0 %v70
    %v81 = vpop.f32.mrf.mxu0
    %v82 = vadd.f32 %v60, %v81
    %v83 = vpop.f32.mrf.mxu0
    %84 = vdwg.mxu0
    %v85 = vmax.f32 %v82, 0.0
    %v86 = vpack.c.bf16 %v85, %v85
    %v87 = vld [vmem:[%s2] sm:$0xf]
    %v88 = vld [vmem:[%s2 + $0x4] sm:$0xf]
    %v89 = vld [vmem:[%s2 + $0x8] sm:$0xf]
    %v90 = vld [vmem:[%s2 + $0xc] sm:$0xf]
    %v91 = vld [vmem:[%s2 + $0x10] sm:$0xf]
    %v92 = vld [vmem:[%s2 + $0x14] sm:$0xf]
    %v93 = vld [vmem:[%s2 + $0x18] sm:$0xf]
    %v94 = vld [vmem:[%s2 + $0x1c] sm:$0xf]
    %v95 = vld [vmem:[%s2 + $0x20] sm:$0xf]
    %v96 = vld [vmem:[%s2 + $0x24] sm:$0xf]
    %v97 = vld [vmem:[%s2 + $0x28] sm:$0xf]
    %v98 = vld [vmem:[%s2 + $0x2c] sm:$0xf]
    %v99 = vld [vmem:[%s2 + $0x30] sm:$0xf]
    %v100 = vld [vmem:[%s2 + $0x34] sm:$0xf]
    %v101 = vld [vmem:[%s2 + $0x38] sm:$0xf]
    %v102 = vld [vmem:[%s2 + $0x3c] sm:$0xf]
    %v104 = vperm.slane %v55, 0
    %v122 = vunpack.c.l.b16 %v87
    %v123 = vunpack.c.l.b16 %v88
    %v124 = vunpack.c.l.b16 %v89
    %v125 = vunpack.c.l.b16 %v90
    %v126 = vunpack.c.l.b16 %v91
    %v127 = vunpack.c.l.b16 %v92
    %v128 = vunpack.c.l.b16 %v93
    %v129 = vunpack.c.l.b16 %v94
    %v130 = vunpack.c.l.b16 %v95
    %v131 = vunpack.c.l.b16 %v96
    %v132 = vunpack.c.l.b16 %v97
    %v133 = vunpack.c.l.b16 %v98
    %v134 = vunpack.c.l.b16 %v99
    %v135 = vunpack.c.l.b16 %v100
    %v136 = vunpack.c.l.b16 %v101
    %v137 = vunpack.c.l.b16 %v102
    %v138 = vpack.c.b16 %v123, %v122
    %v139 = vpack.c.b16 %v125, %v124
    %v140 = vpack.c.b16 %v127, %v126
    %v141 = vpack.c.b16 %v129, %v128
    %v142 = vpack.c.b16 %v131, %v130
    %v143 = vpack.c.b16 %v133, %v132
    %v144 = vpack.c.b16 %v135, %v134
    %v145 = vpack.c.b16 %v137, %v136
    %154 = vmatpush.bf16.msra.mxu0 %v145
    %155 = vmatpush.bf16.msra.mxu0 %v144
    %156 = vmatpush.bf16.msra.mxu0 %v143
    %157 = vmatpush.bf16.msra.mxu0 %v142
    %158 = vmatpush.bf16.msra.mxu0 %v141
    %159 = vmatpush.bf16.msra.mxu0 %v140
    %160 = vmatpush.bf16.msra.mxu0 %v139
    %161 = vmatpush.bf16.msra.mxu0 %v138
    %162 = vmatmul.bf16.gmra.mxu0 %v86
    %v163 = vpop.f32.mrf.mxu0
    %v164 = vadd.f32 %v104, %v163
    %v165 = vpop.f32.mrf.mxu0
    %166 = vdwg.mxu0
    %v167 = vmax.f32 %v164, 0.0
    %v168 = vpack.c.bf16 %v167, %v167
    %v169 = vld [vmem:[%s3] sm:$0xf]
    %v170 = vld [vmem:[%s3 + $0x4] sm:$0xf]
    %v171 = vld [vmem:[%s3 + $0x8] sm:$0xf]
    %v172 = vld [vmem:[%s3 + $0xc] sm:$0xf]
    %v173 = vld [vmem:[%s3 + $0x10] sm:$0xf]
    %v174 = vld [vmem:[%s3 + $0x14] sm:$0xf]
    %v175 = vld [vmem:[%s3 + $0x18] sm:$0xf]
    %v176 = vld [vmem:[%s3 + $0x1c] sm:$0xf]
    %v177 = vld [vmem:[%s3 + $0x20] sm:$0xf]
    %v178 = vld [vmem:[%s3 + $0x24] sm:$0xf]
    %v179 = vld [vmem:[%s3 + $0x28] sm:$0xf]
    %v180 = vld [vmem:[%s3 + $0x2c] sm:$0xf]
    %v181 = vld [vmem:[%s3 + $0x30] sm:$0xf]
    %v182 = vld [vmem:[%s3 + $0x34] sm:$0xf]
    %v183 = vld [vmem:[%s3 + $0x38] sm:$0xf]
    %v184 = vld [vmem:[%s3 + $0x3c] sm:$0xf]
    %v186 = vperm.slane %v56, 0
    %v204 = vunpack.c.l.b16 %v169
    %v205 = vunpack.c.l.b16 %v170
    %v206 = vunpack.c.l.b16 %v171
    %v207 = vunpack.c.l.b16 %v172
    %v208 = vunpack.c.l.b16 %v173
    %v209 = vunpack.c.l.b16 %v174
    %v210 = vunpack.c.l.b16 %v175
    %v211 = vunpack.c.l.b16 %v176
    %v212 = vunpack.c.l.b16 %v177
    %v213 = vunpack.c.l.b16 %v178
    %v214 = vunpack.c.l.b16 %v179
    %v215 = vunpack.c.l.b16 %v180
    %v216 = vunpack.c.l.b16 %v181
    %v217 = vunpack.c.l.b16 %v182
    %v218 = vunpack.c.l.b16 %v183
    %v219 = vunpack.c.l.b16 %v184
    %v220 = vpack.c.b16 %v205, %v204
    %v221 = vpack.c.b16 %v207, %v206
    %v222 = vpack.c.b16 %v209, %v208
    %v223 = vpack.c.b16 %v211, %v210
    %v224 = vpack.c.b16 %v213, %v212
    %v225 = vpack.c.b16 %v215, %v214
    %v226 = vpack.c.b16 %v217, %v216
    %v227 = vpack.c.b16 %v219, %v218
    %236 = vmatpush.bf16.msra.mxu0 %v227
    %237 = vmatpush.bf16.msra.mxu0 %v226
    %238 = vmatpush.bf16.msra.mxu0 %v225
    %239 = vmatpush.bf16.msra.mxu0 %v224
    %240 = vmatpush.bf16.msra.mxu0 %v223
    %241 = vmatpush.bf16.msra.mxu0 %v222
    %242 = vmatpush.bf16.msra.mxu0 %v221
    %243 = vmatpush.bf16.msra.mxu0 %v220
    %244 = vmatmul.bf16.gmra.mxu0 %v168
    %v245 = vpop.f32.mrf.mxu0
    %v246 = vadd.f32 %v186, %v245
    %v247 = vpop.f32.mrf.mxu0
    %248 = vdwg.mxu0
    %vm249 = vcmask 64512
    %250 = vst.msk [vmem:[#allocation7] sm:$0xff] %vm249, %v246
    // Predicated region
    $region30: #{tpu_custom_call.1} parent=1 // pred_check
      _
    $region31: #{tpu_custom_call.1} parent=1 // pred_check_branch
      %252 = sbr.rel (0) target = $region33
    $region32: #{tpu_custom_call.1} parent=1 // pred_region
      %254 = vsyncadd [#allocation4], 0
      %s256 = sshll.u32 [#allocation7], 4
      %s257 = int_to_ptr.vmem [resolvable:$true] %s256
      %s258 = sshll.u32 %s5, 4
      %s259 = int_to_ptr.hbm [resolvable:$true] %s258
      %261 = dma.vmem_to_hbm [thread:$0]  %s257, 128, %s259, [#allocation4]
    $region33: #{tpu_custom_call.1} parent=1 // pred_fallthru
      _
    // Predicated region
    $region34: #{tpu_custom_call.1} parent=1 // pred_check
      _
    $region35: #{tpu_custom_call.1} parent=1 // pred_check_branch
      %263 = sbr.rel (0) target = $region37
    $region36: #{tpu_custom_call.1} parent=1 // pred_region
      %265 = dma.done [#allocation4], 128
    $region37: #{tpu_custom_call.1} parent=1 // pred_fallthru
      _
    %266 = vsyncpa [#allocation3], 1
    %267 = vsyncpa [#allocation6], 1
    %268 = vsyncpa [#allocation4], 1

</llo_original>
